<compile_context>
chip_gen: v7x
topology: tpu7x:2x2x1
jax: 0.10.0
libtpu: 0.0.40
codegen_flags: <defaults>
</compile_context>

<pallas_src>
import jax
import jax.numpy as jnp
from jax.experimental import pallas as pl
from jax.experimental.pallas import tpu as pltpu


def _hbm_copy_kernel(x_hbm, o_hbm, sem):
    # Single HBM->HBM DMA of the (already metadata-squeezed) input into the
    # freshly-allocated output buffer.  One DMA engine transfer; no
    # HBM->VMEM->HBM round trip, no vld/vst bundle work.
    cp = pltpu.make_async_copy(x_hbm, o_hbm, sem)
    cp.start()
    cp.wait()


def pallas_squeeze(x: jax.Array) -> jax.Array:
    """torch.squeeze(x): drop every dim of size 1."""
    in_shape = tuple(x.shape)
    out_shape = tuple(d for d in in_shape if d != 1)

    # Degenerate cases: pure metadata, no kernel launch (avoids per-step grid
    # overhead and the rank-0 VMEM-block lowering hazard).
    if out_shape == in_shape:
        return x
    if len(out_shape) == 0:
        return jnp.squeeze(x)

    # The squeeze itself: zero-copy reshape of the contiguous row-major
    # buffer, so the kernel sees matching src/dst shapes and the data
    # movement collapses to one contiguous DMA.
    x_sq = jnp.reshape(x, out_shape)

    return pl.pallas_call(
        _hbm_copy_kernel,
        out_shape=jax.ShapeDtypeStruct(out_shape, x.dtype),
        in_specs=[pl.BlockSpec(memory_space=pl.ANY)],    # raw HBM ref, no auto-DMA
        out_specs=pl.BlockSpec(memory_space=pl.ANY),     # raw HBM ref, written by DMA
        scratch_shapes=[pltpu.SemaphoreType.DMA(())],
    )(x_sq)


if __name__ == "__main__":
    # Rank-4 f32 input with one size-1 dim (NCHW with C=1), matching the
    # Squeeze_F32_R4 unit-test shape class.
    key = jax.random.PRNGKey(0)
    x = jax.random.normal(key, (2, 1, 16, 16), dtype=jnp.float32)

    y = pallas_squeeze(x)
    y = jax.block_until_ready(y)

    # Reference: torch.squeeze removes all size-1 dims == jnp.squeeze
    y_ref = jnp.squeeze(x)
    assert y.shape == y_ref.shape == (2, 16, 16), y.shape
    assert y.dtype == jnp.float32
    assert jnp.array_equal(y, y_ref)

    # Also exercise the degenerate paths.
    x_nosq = jax.random.normal(key, (2, 4, 16, 16), dtype=jnp.float32)
    assert pallas_squeeze(x_nosq).shape == (2, 4, 16, 16)
    x_all1 = jnp.ones((1, 1, 1, 1), dtype=jnp.float32)
    assert pallas_squeeze(x_all1).shape == ()

    print("KERNEL_OK")
</pallas_src>

<mosaic_0001>
module attributes {stable_mosaic.version = 11 : i64} {
  func.func @_hbm_copy_kernel(%arg0: memref<2x16x16xf32, #tpu.memory_space<any>>, %arg1: memref<2x16x16xf32, #tpu.memory_space<any>>, %arg2: memref<!tpu.dma_semaphore, #tpu.memory_space<semaphore_mem>>) attributes {dimension_semantics = [], scalar_prefetch = 0 : i64, scratch_operands = 1 : i64, tpu.core_type = #tpu.core_type<tc>} {
    tpu.enqueue_dma source(%arg0 : memref<2x16x16xf32, #tpu.memory_space<any>>) target(%arg1 : memref<2x16x16xf32, #tpu.memory_space<any>>) target_semaphore(%arg2 : memref<!tpu.dma_semaphore, #tpu.memory_space<semaphore_mem>>)
    tpu.wait_dma2 semaphore(%arg2 : memref<!tpu.dma_semaphore, #tpu.memory_space<semaphore_mem>>) src(%arg0 : memref<2x16x16xf32, #tpu.memory_space<any>>) dst(%arg1 : memref<2x16x16xf32, #tpu.memory_space<any>>)
    return
  }
}

</mosaic_0001>

<llo_original>
// kernel: tpu_custom_call.1
$region0: #{tpu_custom_call.1}
  #allocation0 [shape = 'u32[]', space=smem, size = 0x4, offset = 0x4, fixed_abs, tag = 'smem constant byte address 0x4 - core index']
  #allocation1 [shape = 'u32[144,128]{1,0:T(1,128)}', space=vmem, size = 0x12000, scoped, tag = 'internal scratch']
  #allocation2 [shape = 's32[1]{0}', space=sflag, size = 0x4, scoped, tag = 'scratch operand']
  #allocation3 [shape = 's32[]', space=sflag, size = 0x4, offset = 0, fixed_abs, tag = 'sflag constant byte address 0x0 - dummy sync flag']
  #allocation4 [shape = 'u32[0]{0}', space=smem, size = 0, offset = 0, fixed_abs, tag = 'smem constant byte address 0x0 - null']
  %s0 = inlined_call_operand.hbm [shape: f32[2,16,16], index: 0, kind: input, shape index: {}]
  %s1 = inlined_call_operand.hbm [shape: f32[2,16,16], index: 1, kind: output, shape index: {}]
  %s2 = sld [smem:[#allocation0]]
  $region2: #{tpu_custom_call.1} parent=0
    _
  %s4 = ssub.s32 1, %s2
  %s5 = scalar_select 0, %s4, %s2
  %s7 = sshll.u32 1, 14
  %s8 = sxor.u32 4294967295, %s7
  %s11 = sshll.u32 3, 24
  %s12 = sxor.u32 4294967295, %s11
  %s13 = sand.u32 0, %s12
  %s15 = sor.u32 %s13, 0
  %18 = dma.general %s0, 512, %s1, [#allocation2], [#allocation3], [#allocation4], %s15, 0
  %s19 = smul.u32 2, 16
  %s20 = smul.u32 %s19, 1
  %s21 = sshll.u32 %s20, 4
  %22 = dma.done [#allocation2], %s21
  %23 = vsyncmov [#allocation2]
  %s24 = vpop.sfrf %23
  %p25 = scmp.eq.s32.totalorder %s24, 0
  %p26 = pneg %p25
  %28 = shalt.err (%p26)

</llo_original>
